<compile_context>
chip_gen: v7x
topology: tpu7x:2x2x1
jax: 0.10.0
libtpu: 0.0.40
codegen_flags: <defaults>
</compile_context>

<pallas_src>
from functools import partial

import jax
import jax.numpy as jnp
from jax import lax
from jax.experimental import pallas as pl
from jax.experimental.pallas import tpu as pltpu

NUM_BODIES = 9  # self.num in the PyTorch module ("9body")


def _round_up(a: int, m: int) -> int:
    return (a + m - 1) // m * m


def _pick_tiles(B: int, lane_tile):
    """Choose (grid lane tile, in-kernel compute chunk)."""
    b128 = _round_up(B, 128)
    if lane_tile is None:
        if b128 <= 512:
            tb = b128
        else:
            # ~8 grid steps (>=2 per v7x TC), tiles clamped to [512, 2048] lanes.
            tb = min(2048, max(512, _round_up(b128 // 8, 512)))
    else:
        tb = min(_round_up(int(lane_tile), 128), b128)
    # Inner compute chunk: keeps the live vreg set small no matter how big tb is.
    chunk = 256 if tb % 256 == 0 else 128
    return tb, chunk


def _manybody_kernel(s_ref, o_ref, *, num, chunk):
    """Planar N-body RHS for one batch tile (batch rides the 128-wide lane axis).

    s_ref: [4, num, TB]  input planes  (px, py, vx, vy);  s_ref[p, i, b].
    o_ref: [4, num, TB]  output planes (vx, vy, ax, ay).
    """
    tb = o_ref.shape[2]
    n_chunks = tb // chunk  # static

    def do_chunk(c, carry):
        start = pl.multiple_of(c * chunk, chunk)
        sl = pl.ds(start, chunk)

        # Velocity pass-through: dx[:, :2*num] = x[:, 2*num:]  (plane layout).
        o_ref[0, :, sl] = s_ref[2, :, sl]
        o_ref[1, :, sl] = s_ref[3, :, sl]

        px = s_ref[0, :, sl]                       # [num, chunk]
        py = s_ref[1, :, sl]
        rows = lax.broadcasted_iota(jnp.int32, (num, chunk), 0)

        # Static unroll over the 9 target bodies: only [num, chunk] planes are
        # live at any point (no [num, num, chunk] broadcast -> no vreg spills).
        for i in range(num):
            dxi = px[i][None, :] - px              # d[j, b] = p_i[b] - p_j[b]
            dyi = py[i][None, :] - py
            # +1 on the j == i row keeps rsqrt finite; the numerator there is
            # exactly 0, so the diagonal contributes 0 with no second mask.
            r2 = dxi * dxi + dyi * dyi + (rows == i).astype(px.dtype)
            inv_r = lax.rsqrt(r2)                  # EUP rsqrt (exact), no divides
            w = inv_r * inv_r * inv_r              # 1 / r^3
            # a_i = sum_{j != i} -(p_i - p_j)/r^3 : one sublane reduce per comp,
            # stored as a lane-dense single-row (sublane-masked) vst.
            o_ref[2, i, sl] = -jnp.sum(dxi * w, axis=0)
            o_ref[3, i, sl] = -jnp.sum(dyi * w, axis=0)
        return carry

    lax.fori_loop(0, n_chunks, do_chunk, 0)


def manybody_forward(t, x, *, num=NUM_BODIES, lane_tile=None):
    """Pallas wrapper. `t` is unused (kept for ODE-style signature parity)."""
    del t
    B, D = x.shape
    assert D == 4 * num, f"expected last dim {4 * num}, got {D}"

    # [B, 4*num] interleaved -> SoA planes [4, num, B]; plane order px, py, vx, vy.
    # (reshape before/after the transpose is free; this is a single XLA transpose)
    s = x.reshape(B, 2, num, 2).transpose(1, 3, 2, 0).reshape(4, num, B)

    tb, chunk = _pick_tiles(B, lane_tile)
    b_pad = _round_up(B, tb)
    if b_pad != B:
        # Edge-pad: padded lanes hold valid (non-coincident) bodies -> no inf/nan.
        s = jnp.pad(s, ((0, 0), (0, 0), (0, b_pad - B)), mode="edge")

    out = pl.pallas_call(
        partial(_manybody_kernel, num=num, chunk=chunk),
        out_shape=jax.ShapeDtypeStruct((4, num, b_pad), x.dtype),
        grid=(b_pad // tb,),
        in_specs=[pl.BlockSpec((4, num, tb), lambda b: (0, 0, b))],
        out_specs=pl.BlockSpec((4, num, tb), lambda b: (0, 0, b)),
        compiler_params=pltpu.CompilerParams(dimension_semantics=("parallel",)),
        cost_estimate=pl.CostEstimate(
            flops=12 * b_pad * num * num,
            transcendentals=b_pad * num * num,
            bytes_accessed=2 * (4 * num * b_pad * 4),
        ),
    )(s)

    # planes (half, comp, body, batch) -> interleaved [B, 4*num], dropping padding.
    dx = (out.reshape(2, 2, num, b_pad)[..., :B]
              .transpose(3, 0, 2, 1)
              .reshape(B, 4 * num))
    return dx


def manybody_reference(t, x, num=NUM_BODIES):
    """Pure-JAX reference mirroring the PyTorch forward exactly (pow(1.5)+div)."""
    del t
    dx = jnp.zeros_like(x)
    dx = dx.at[:, : num * 2].set(x[:, num * 2:])
    for i in range(num):
        acc = jnp.zeros((x.shape[0], 2), x.dtype)
        for j in range(num):
            if j == i:
                continue
            xi = x[:, i * 2: i * 2 + 2]
            xj = x[:, j * 2: j * 2 + 2]
            r = (xi[:, 0:1] - xj[:, 0:1]) ** 2 + (xi[:, 1:2] - xj[:, 1:2]) ** 2
            acc = acc + jnp.concatenate(
                (-(xi[:, 0:1] - xj[:, 0:1]) / r ** 1.5,
                 -(xi[:, 1:2] - xj[:, 1:2]) / r ** 1.5),
                axis=1,
            )
        dx = dx.at[:, num * 2 + i * 2: num * 2 + i * 2 + 2].add(acc)
    return dx


if __name__ == "__main__":
    fwd = jax.jit(manybody_forward, static_argnames=("num", "lane_tile"))
    ref_fn = jax.jit(manybody_reference, static_argnames=("num",))

    key = jax.random.PRNGKey(0)
    t = jnp.float32(0.0)

    # Bodies near a 3x3 grid (spacing 2) with +-0.5 jitter -> min pair distance >= 1,
    # so forces are O(1) and the f32 comparison is well conditioned.
    gx, gy = jnp.meshgrid(jnp.arange(3.0), jnp.arange(3.0), indexing="ij")
    base = jnp.stack([gx.ravel(), gy.ravel()], axis=-1).astype(jnp.float32) * 2.0  # [9, 2]

    # (B, lane_tile) cases: tiny (pads to one 128-lane tile), padded multi-step,
    # default multi-step, and an explicit big tile exercising the in-kernel chunk loop.
    cases = [(8, None), (600, None), (1024, None), (1024, 2048)]
    for B, lane_tile in cases:
        kpos, kvel, key = jax.random.split(key, 3)
        jitter = jax.random.uniform(kpos, (B, NUM_BODIES, 2), jnp.float32,
                                    minval=-0.5, maxval=0.5)
        pos = (base[None] + jitter).reshape(B, 2 * NUM_BODIES)
        vel = jax.random.normal(kvel, (B, 2 * NUM_BODIES), jnp.float32)
        x = jnp.concatenate([pos, vel], axis=1)

        out = jax.block_until_ready(fwd(t, x, lane_tile=lane_tile))
        ref = ref_fn(t, x)

        assert out.shape == x.shape and out.dtype == x.dtype
        # Kernel uses rsqrt+muls, reference uses pow(1.5)+div; agree to ~1e-6 rel in f32.
        assert jnp.allclose(out, ref, rtol=1e-4, atol=1e-5), \
            f"mismatch vs reference at B={B}, lane_tile={lane_tile}"

    print("KERNEL_OK")
</pallas_src>

<mosaic_0001>
module attributes {stable_mosaic.version = 11 : i64} {
  func.func @_manybody_kernel(%arg0: i32, %arg1: memref<4x9x128xf32, #tpu.memory_space<vmem>>, %arg2: memref<4x9x128xf32, #tpu.memory_space<vmem>>) attributes {dimension_semantics = [#tpu.dimension_semantics<parallel>], iteration_bounds = array<i64: 1>, scalar_prefetch = 0 : i64, scratch_operands = 0 : i64, tpu.core_type = #tpu.core_type<tc>, window_params = [{transform_indices = @transform_0, window_bounds = array<i64: 4, 9, 128>}, {transform_indices = @transform_1, window_bounds = array<i64: 4, 9, 128>}]} {
    %c0_i32 = arith.constant 0 : i32
    %c128_i32 = arith.constant 128 : i32
    %0 = arith.muli %c0_i32, %c128_i32 : i32
    %1 = tpu.assume_multiple %0, 128 : i32
    %c2 = arith.constant 2 : index
    %c0 = arith.constant 0 : index
    %2 = arith.index_cast %1 : i32 to index
    %3 = vector.load %arg1[%c2, %c0, %2] : memref<4x9x128xf32, #tpu.memory_space<vmem>>, vector<1x9x128xf32>
    %4 = vector.shape_cast %3 : vector<1x9x128xf32> to vector<9x128xf32>
    %c0_0 = arith.constant 0 : index
    %c0_1 = arith.constant 0 : index
    %5 = arith.index_cast %1 : i32 to index
    %6 = vector.load %arg2[%c0_0, %c0_1, %5] : memref<4x9x128xf32, #tpu.memory_space<vmem>>, vector<1x9x128xf32>
    %7 = vector.shape_cast %6 : vector<1x9x128xf32> to vector<9x128xf32>
    %8 = vector.shape_cast %4 : vector<9x128xf32> to vector<1x9x128xf32>
    tpu.vector_store %arg2[%c0_0, %c0_1, %5], %8 {strides = array<i32>} : memref<4x9x128xf32, #tpu.memory_space<vmem>>, vector<1x9x128xf32>,
    %c3 = arith.constant 3 : index
    %c0_2 = arith.constant 0 : index
    %9 = arith.index_cast %1 : i32 to index
    %10 = vector.load %arg1[%c3, %c0_2, %9] : memref<4x9x128xf32, #tpu.memory_space<vmem>>, vector<1x9x128xf32>
    %11 = vector.shape_cast %10 : vector<1x9x128xf32> to vector<9x128xf32>
    %c1 = arith.constant 1 : index
    %c0_3 = arith.constant 0 : index
    %12 = arith.index_cast %1 : i32 to index
    %13 = vector.load %arg2[%c1, %c0_3, %12] : memref<4x9x128xf32, #tpu.memory_space<vmem>>, vector<1x9x128xf32>
    %14 = vector.shape_cast %13 : vector<1x9x128xf32> to vector<9x128xf32>
    %15 = vector.shape_cast %11 : vector<9x128xf32> to vector<1x9x128xf32>
    tpu.vector_store %arg2[%c1, %c0_3, %12], %15 {strides = array<i32>} : memref<4x9x128xf32, #tpu.memory_space<vmem>>, vector<1x9x128xf32>,
    %c0_4 = arith.constant 0 : index
    %c0_5 = arith.constant 0 : index
    %16 = arith.index_cast %1 : i32 to index
    %17 = vector.load %arg1[%c0_4, %c0_5, %16] : memref<4x9x128xf32, #tpu.memory_space<vmem>>, vector<1x9x128xf32>
    %18 = vector.shape_cast %17 : vector<1x9x128xf32> to vector<9x128xf32>
    %c1_6 = arith.constant 1 : index
    %c0_7 = arith.constant 0 : index
    %19 = arith.index_cast %1 : i32 to index
    %20 = vector.load %arg1[%c1_6, %c0_7, %19] : memref<4x9x128xf32, #tpu.memory_space<vmem>>, vector<1x9x128xf32>
    %21 = vector.shape_cast %20 : vector<1x9x128xf32> to vector<9x128xf32>
    %22 = tpu.iota {dimensions = array<i32: 0>} : vector<9x128xi32>
    %23 = vector.extract_strided_slice %18 {offsets = [0, 0], sizes = [1, 128], strides = [1, 1]} : vector<9x128xf32> to vector<1x128xf32>
    %24 = vector.shape_cast %23 : vector<1x128xf32> to vector<128xf32>
    %25 = vector.shape_cast %24 : vector<128xf32> to vector<1x128xf32>
    %26 = vector.broadcast %25 : vector<1x128xf32> to vector<9x128xf32>
    %27 = arith.subf %26, %18 : vector<9x128xf32>
    %28 = vector.extract_strided_slice %21 {offsets = [0, 0], sizes = [1, 128], strides = [1, 1]} : vector<9x128xf32> to vector<1x128xf32>
    %29 = vector.shape_cast %28 : vector<1x128xf32> to vector<128xf32>
    %30 = vector.shape_cast %29 : vector<128xf32> to vector<1x128xf32>
    %31 = vector.broadcast %30 : vector<1x128xf32> to vector<9x128xf32>
    %32 = arith.subf %31, %21 : vector<9x128xf32>
    %33 = arith.mulf %27, %27 : vector<9x128xf32>
    %34 = arith.mulf %32, %32 : vector<9x128xf32>
    %35 = arith.addf %33, %34 : vector<9x128xf32>
    %c0_i32_8 = arith.constant 0 : i32
    %36 = vector.broadcast %c0_i32_8 : i32 to vector<9x128xi32>
    %37 = arith.cmpi eq, %22, %36 : vector<9x128xi32>
    %38 = arith.extui %37 : vector<9x128xi1> to vector<9x128xi32>
    %39 = arith.sitofp %38 : vector<9x128xi32> to vector<9x128xf32>
    %40 = arith.addf %35, %39 : vector<9x128xf32>
    %41 = math.rsqrt %40 : vector<9x128xf32>
    %42 = arith.mulf %41, %41 : vector<9x128xf32>
    %43 = arith.mulf %42, %41 : vector<9x128xf32>
    %44 = arith.mulf %27, %43 : vector<9x128xf32>
    %cst = arith.constant dense<0.000000e+00> : vector<128xf32>
    %45 = vector.multi_reduction <add>, %44, %cst [0] : vector<9x128xf32> to vector<128xf32>
    %cst_9 = arith.constant 0.000000e+00 : f32
    %46 = vector.broadcast %cst_9 : f32 to vector<128xf32>
    %47 = arith.subf %46, %45 : vector<128xf32>
    %c2_10 = arith.constant 2 : index
    %c0_11 = arith.constant 0 : index
    %48 = arith.index_cast %1 : i32 to index
    %49 = vector.load %arg2[%c2_10, %c0_11, %48] : memref<4x9x128xf32, #tpu.memory_space<vmem>>, vector<1x1x128xf32>
    %50 = vector.shape_cast %49 : vector<1x1x128xf32> to vector<128xf32>
    %51 = vector.shape_cast %47 : vector<128xf32> to vector<1x1x128xf32>
    tpu.vector_store %arg2[%c2_10, %c0_11, %48], %51 {strides = array<i32>} : memref<4x9x128xf32, #tpu.memory_space<vmem>>, vector<1x1x128xf32>,
    %52 = arith.mulf %32, %43 : vector<9x128xf32>
    %cst_12 = arith.constant dense<0.000000e+00> : vector<128xf32>
    %53 = vector.multi_reduction <add>, %52, %cst_12 [0] : vector<9x128xf32> to vector<128xf32>
    %cst_13 = arith.constant 0.000000e+00 : f32
    %54 = vector.broadcast %cst_13 : f32 to vector<128xf32>
    %55 = arith.subf %54, %53 : vector<128xf32>
    %c3_14 = arith.constant 3 : index
    %c0_15 = arith.constant 0 : index
    %56 = arith.index_cast %1 : i32 to index
    %57 = vector.load %arg2[%c3_14, %c0_15, %56] : memref<4x9x128xf32, #tpu.memory_space<vmem>>, vector<1x1x128xf32>
    %58 = vector.shape_cast %57 : vector<1x1x128xf32> to vector<128xf32>
    %59 = vector.shape_cast %55 : vector<128xf32> to vector<1x1x128xf32>
    tpu.vector_store %arg2[%c3_14, %c0_15, %56], %59 {strides = array<i32>} : memref<4x9x128xf32, #tpu.memory_space<vmem>>, vector<1x1x128xf32>,
    %60 = vector.extract_strided_slice %18 {offsets = [1, 0], sizes = [1, 128], strides = [1, 1]} : vector<9x128xf32> to vector<1x128xf32>
    %61 = vector.shape_cast %60 : vector<1x128xf32> to vector<128xf32>
    %62 = vector.shape_cast %61 : vector<128xf32> to vector<1x128xf32>
    %63 = vector.broadcast %62 : vector<1x128xf32> to vector<9x128xf32>
    %64 = arith.subf %63, %18 : vector<9x128xf32>
    %65 = vector.extract_strided_slice %21 {offsets = [1, 0], sizes = [1, 128], strides = [1, 1]} : vector<9x128xf32> to vector<1x128xf32>
    %66 = vector.shape_cast %65 : vector<1x128xf32> to vector<128xf32>
    %67 = vector.shape_cast %66 : vector<128xf32> to vector<1x128xf32>
    %68 = vector.broadcast %67 : vector<1x128xf32> to vector<9x128xf32>
    %69 = arith.subf %68, %21 : vector<9x128xf32>
    %70 = arith.mulf %64, %64 : vector<9x128xf32>
    %71 = arith.mulf %69, %69 : vector<9x128xf32>
    %72 = arith.addf %70, %71 : vector<9x128xf32>
    %c1_i32 = arith.constant 1 : i32
    %73 = vector.broadcast %c1_i32 : i32 to vector<9x128xi32>
    %74 = arith.cmpi eq, %22, %73 : vector<9x128xi32>
    %75 = arith.extui %74 : vector<9x128xi1> to vector<9x128xi32>
    %76 = arith.sitofp %75 : vector<9x128xi32> to vector<9x128xf32>
    %77 = arith.addf %72, %76 : vector<9x128xf32>
    %78 = math.rsqrt %77 : vector<9x128xf32>
    %79 = arith.mulf %78, %78 : vector<9x128xf32>
    %80 = arith.mulf %79, %78 : vector<9x128xf32>
    %81 = arith.mulf %64, %80 : vector<9x128xf32>
    %cst_16 = arith.constant dense<0.000000e+00> : vector<128xf32>
    %82 = vector.multi_reduction <add>, %81, %cst_16 [0] : vector<9x128xf32> to vector<128xf32>
    %cst_17 = arith.constant 0.000000e+00 : f32
    %83 = vector.broadcast %cst_17 : f32 to vector<128xf32>
    %84 = arith.subf %83, %82 : vector<128xf32>
    %c2_18 = arith.constant 2 : index
    %c1_19 = arith.constant 1 : index
    %85 = arith.index_cast %1 : i32 to index
    %86 = vector.load %arg2[%c2_18, %c1_19, %85] : memref<4x9x128xf32, #tpu.memory_space<vmem>>, vector<1x1x128xf32>
    %87 = vector.shape_cast %86 : vector<1x1x128xf32> to vector<128xf32>
    %88 = vector.shape_cast %84 : vector<128xf32> to vector<1x1x128xf32>
    tpu.vector_store %arg2[%c2_18, %c1_19, %85], %88 {strides = array<i32>} : memref<4x9x128xf32, #tpu.memory_space<vmem>>, vector<1x1x128xf32>,
    %89 = arith.mulf %69, %80 : vector<9x128xf32>
    %cst_20 = arith.constant dense<0.000000e+00> : vector<128xf32>
    %90 = vector.multi_reduction <add>, %89, %cst_20 [0] : vector<9x128xf32> to vector<128xf32>
    %cst_21 = arith.constant 0.000000e+00 : f32
    %91 = vector.broadcast %cst_21 : f32 to vector<128xf32>
    %92 = arith.subf %91, %90 : vector<128xf32>
    %c3_22 = arith.constant 3 : index
    %c1_23 = arith.constant 1 : index
    %93 = arith.index_cast %1 : i32 to index
    %94 = vector.load %arg2[%c3_22, %c1_23, %93] : memref<4x9x128xf32, #tpu.memory_space<vmem>>, vector<1x1x128xf32>
    %95 = vector.shape_cast %94 : vector<1x1x128xf32> to vector<128xf32>
    %96 = vector.shape_cast %92 : vector<128xf32> to vector<1x1x128xf32>
    tpu.vector_store %arg2[%c3_22, %c1_23, %93], %96 {strides = array<i32>} : memref<4x9x128xf32, #tpu.memory_space<vmem>>, vector<1x1x128xf32>,
    %97 = vector.extract_strided_slice %18 {offsets = [2, 0], sizes = [1, 128], strides = [1, 1]} : vector<9x128xf32> to vector<1x128xf32>
    %98 = vector.shape_cast %97 : vector<1x128xf32> to vector<128xf32>
    %99 = vector.shape_cast %98 : vector<128xf32> to vector<1x128xf32>
    %100 = vector.broadcast %99 : vector<1x128xf32> to vector<9x128xf32>
    %101 = arith.subf %100, %18 : vector<9x128xf32>
    %102 = vector.extract_strided_slice %21 {offsets = [2, 0], sizes = [1, 128], strides = [1, 1]} : vector<9x128xf32> to vector<1x128xf32>
    %103 = vector.shape_cast %102 : vector<1x128xf32> to vector<128xf32>
    %104 = vector.shape_cast %103 : vector<128xf32> to vector<1x128xf32>
    %105 = vector.broadcast %104 : vector<1x128xf32> to vector<9x128xf32>
    %106 = arith.subf %105, %21 : vector<9x128xf32>
    %107 = arith.mulf %101, %101 : vector<9x128xf32>
    %108 = arith.mulf %106, %106 : vector<9x128xf32>
    %109 = arith.addf %107, %108 : vector<9x128xf32>
    %c2_i32 = arith.constant 2 : i32
    %110 = vector.broadcast %c2_i32 : i32 to vector<9x128xi32>
    %111 = arith.cmpi eq, %22, %110 : vector<9x128xi32>
    %112 = arith.extui %111 : vector<9x128xi1> to vector<9x128xi32>
    %113 = arith.sitofp %112 : vector<9x128xi32> to vector<9x128xf32>
    %114 = arith.addf %109, %113 : vector<9x128xf32>
    %115 = math.rsqrt %114 : vector<9x128xf32>
    %116 = arith.mulf %115, %115 : vector<9x128xf32>
    %117 = arith.mulf %116, %115 : vector<9x128xf32>
    %118 = arith.mulf %101, %117 : vector<9x128xf32>
    %cst_24 = arith.constant dense<0.000000e+00> : vector<128xf32>
    %119 = vector.multi_reduction <add>, %118, %cst_24 [0] : vector<9x128xf32> to vector<128xf32>
    %cst_25 = arith.constant 0.000000e+00 : f32
    %120 = vector.broadcast %cst_25 : f32 to vector<128xf32>
    %121 = arith.subf %120, %119 : vector<128xf32>
    %c2_26 = arith.constant 2 : index
    %c2_27 = arith.constant 2 : index
    %122 = arith.index_cast %1 : i32 to index
    %123 = vector.load %arg2[%c2_26, %c2_27, %122] : memref<4x9x128xf32, #tpu.memory_space<vmem>>, vector<1x1x128xf32>
    %124 = vector.shape_cast %123 : vector<1x1x128xf32> to vector<128xf32>
    %125 = vector.shape_cast %121 : vector<128xf32> to vector<1x1x128xf32>
    tpu.vector_store %arg2[%c2_26, %c2_27, %122], %125 {strides = array<i32>} : memref<4x9x128xf32, #tpu.memory_space<vmem>>, vector<1x1x128xf32>,
    %126 = arith.mulf %106, %117 : vector<9x128xf32>
    %cst_28 = arith.constant dense<0.000000e+00> : vector<128xf32>
    %127 = vector.multi_reduction <add>, %126, %cst_28 [0] : vector<9x128xf32> to vector<128xf32>
    %cst_29 = arith.constant 0.000000e+00 : f32
    %128 = vector.broadcast %cst_29 : f32 to vector<128xf32>
    %129 = arith.subf %128, %127 : vector<128xf32>
    %c3_30 = arith.constant 3 : index
    %c2_31 = arith.constant 2 : index
    %130 = arith.index_cast %1 : i32 to index
    %131 = vector.load %arg2[%c3_30, %c2_31, %130] : memref<4x9x128xf32, #tpu.memory_space<vmem>>, vector<1x1x128xf32>
    %132 = vector.shape_cast %131 : vector<1x1x128xf32> to vector<128xf32>
    %133 = vector.shape_cast %129 : vector<128xf32> to vector<1x1x128xf32>
    tpu.vector_store %arg2[%c3_30, %c2_31, %130], %133 {strides = array<i32>} : memref<4x9x128xf32, #tpu.memory_space<vmem>>, vector<1x1x128xf32>,
    %134 = vector.extract_strided_slice %18 {offsets = [3, 0], sizes = [1, 128], strides = [1, 1]} : vector<9x128xf32> to vector<1x128xf32>
    %135 = vector.shape_cast %134 : vector<1x128xf32> to vector<128xf32>
    %136 = vector.shape_cast %135 : vector<128xf32> to vector<1x128xf32>
    %137 = vector.broadcast %136 : vector<1x128xf32> to vector<9x128xf32>
    %138 = arith.subf %137, %18 : vector<9x128xf32>
    %139 = vector.extract_strided_slice %21 {offsets = [3, 0], sizes = [1, 128], strides = [1, 1]} : vector<9x128xf32> to vector<1x128xf32>
    %140 = vector.shape_cast %139 : vector<1x128xf32> to vector<128xf32>
    %141 = vector.shape_cast %140 : vector<128xf32> to vector<1x128xf32>
    %142 = vector.broadcast %141 : vector<1x128xf32> to vector<9x128xf32>
    %143 = arith.subf %142, %21 : vector<9x128xf32>
    %144 = arith.mulf %138, %138 : vector<9x128xf32>
    %145 = arith.mulf %143, %143 : vector<9x128xf32>
    %146 = arith.addf %144, %145 : vector<9x128xf32>
    %c3_i32 = arith.constant 3 : i32
    %147 = vector.broadcast %c3_i32 : i32 to vector<9x128xi32>
    %148 = arith.cmpi eq, %22, %147 : vector<9x128xi32>
    %149 = arith.extui %148 : vector<9x128xi1> to vector<9x128xi32>
    %150 = arith.sitofp %149 : vector<9x128xi32> to vector<9x128xf32>
    %151 = arith.addf %146, %150 : vector<9x128xf32>
    %152 = math.rsqrt %151 : vector<9x128xf32>
    %153 = arith.mulf %152, %152 : vector<9x128xf32>
    %154 = arith.mulf %153, %152 : vector<9x128xf32>
    %155 = arith.mulf %138, %154 : vector<9x128xf32>
    %cst_32 = arith.constant dense<0.000000e+00> : vector<128xf32>
    %156 = vector.multi_reduction <add>, %155, %cst_32 [0] : vector<9x128xf32> to vector<128xf32>
    %cst_33 = arith.constant 0.000000e+00 : f32
    %157 = vector.broadcast %cst_33 : f32 to vector<128xf32>
    %158 = arith.subf %157, %156 : vector<128xf32>
    %c2_34 = arith.constant 2 : index
    %c3_35 = arith.constant 3 : index
    %159 = arith.index_cast %1 : i32 to index
    %160 = vector.load %arg2[%c2_34, %c3_35, %159] : memref<4x9x128xf32, #tpu.memory_space<vmem>>, vector<1x1x128xf32>
    %161 = vector.shape_cast %160 : vector<1x1x128xf32> to vector<128xf32>
    %162 = vector.shape_cast %158 : vector<128xf32> to vector<1x1x128xf32>
    tpu.vector_store %arg2[%c2_34, %c3_35, %159], %162 {strides = array<i32>} : memref<4x9x128xf32, #tpu.memory_space<vmem>>, vector<1x1x128xf32>,
    %163 = arith.mulf %143, %154 : vector<9x128xf32>
    %cst_36 = arith.constant dense<0.000000e+00> : vector<128xf32>
    %164 = vector.multi_reduction <add>, %163, %cst_36 [0] : vector<9x128xf32> to vector<128xf32>
    %cst_37 = arith.constant 0.000000e+00 : f32
    %165 = vector.broadcast %cst_37 : f32 to vector<128xf32>
    %166 = arith.subf %165, %164 : vector<128xf32>
    %c3_38 = arith.constant 3 : index
    %c3_39 = arith.constant 3 : index
    %167 = arith.index_cast %1 : i32 to index
    %168 = vector.load %arg2[%c3_38, %c3_39, %167] : memref<4x9x128xf32, #tpu.memory_space<vmem>>, vector<1x1x128xf32>
    %169 = vector.shape_cast %168 : vector<1x1x128xf32> to vector<128xf32>
    %170 = vector.shape_cast %166 : vector<128xf32> to vector<1x1x128xf32>
    tpu.vector_store %arg2[%c3_38, %c3_39, %167], %170 {strides = array<i32>} : memref<4x9x128xf32, #tpu.memory_space<vmem>>, vector<1x1x128xf32>,
    %171 = vector.extract_strided_slice %18 {offsets = [4, 0], sizes = [1, 128], strides = [1, 1]} : vector<9x128xf32> to vector<1x128xf32>
    %172 = vector.shape_cast %171 : vector<1x128xf32> to vector<128xf32>
    %173 = vector.shape_cast %172 : vector<128xf32> to vector<1x128xf32>
    %174 = vector.broadcast %173 : vector<1x128xf32> to vector<9x128xf32>
    %175 = arith.subf %174, %18 : vector<9x128xf32>
    %176 = vector.extract_strided_slice %21 {offsets = [4, 0], sizes = [1, 128], strides = [1, 1]} : vector<9x128xf32> to vector<1x128xf32>
    %177 = vector.shape_cast %176 : vector<1x128xf32> to vector<128xf32>
    %178 = vector.shape_cast %177 : vector<128xf32> to vector<1x128xf32>
    %179 = vector.broadcast %178 : vector<1x128xf32> to vector<9x128xf32>
    %180 = arith.subf %179, %21 : vector<9x128xf32>
    %181 = arith.mulf %175, %175 : vector<9x128xf32>
    %182 = arith.mulf %180, %180 : vector<9x128xf32>
    %183 = arith.addf %181, %182 : vector<9x128xf32>
    %c4_i32 = arith.constant 4 : i32
    %184 = vector.broadcast %c4_i32 : i32 to vector<9x128xi32>
    %185 = arith.cmpi eq, %22, %184 : vector<9x128xi32>
    %186 = arith.extui %185 : vector<9x128xi1> to vector<9x128xi32>
    %187 = arith.sitofp %186 : vector<9x128xi32> to vector<9x128xf32>
    %188 = arith.addf %183, %187 : vector<9x128xf32>
    %189 = math.rsqrt %188 : vector<9x128xf32>
    %190 = arith.mulf %189, %189 : vector<9x128xf32>
    %191 = arith.mulf %190, %189 : vector<9x128xf32>
    %192 = arith.mulf %175, %191 : vector<9x128xf32>
    %cst_40 = arith.constant dense<0.000000e+00> : vector<128xf32>
    %193 = vector.multi_reduction <add>, %192, %cst_40 [0] : vector<9x128xf32> to vector<128xf32>
    %cst_41 = arith.constant 0.000000e+00 : f32
    %194 = vector.broadcast %cst_41 : f32 to vector<128xf32>
    %195 = arith.subf %194, %193 : vector<128xf32>
    %c2_42 = arith.constant 2 : index
    %c4 = arith.constant 4 : index
    %196 = arith.index_cast %1 : i32 to index
    %197 = vector.load %arg2[%c2_42, %c4, %196] : memref<4x9x128xf32, #tpu.memory_space<vmem>>, vector<1x1x128xf32>
    %198 = vector.shape_cast %197 : vector<1x1x128xf32> to vector<128xf32>
    %199 = vector.shape_cast %195 : vector<128xf32> to vector<1x1x128xf32>
    tpu.vector_store %arg2[%c2_42, %c4, %196], %199 {strides = array<i32>} : memref<4x9x128xf32, #tpu.memory_space<vmem>>, vector<1x1x128xf32>,
    %200 = arith.mulf %180, %191 : vector<9x128xf32>
    %cst_43 = arith.constant dense<0.000000e+00> : vector<128xf32>
    %201 = vector.multi_reduction <add>, %200, %cst_43 [0] : vector<9x128xf32> to vector<128xf32>
    %cst_44 = arith.constant 0.000000e+00 : f32
    %202 = vector.broadcast %cst_44 : f32 to vector<128xf32>
    %203 = arith.subf %202, %201 : vector<128xf32>
    %c3_45 = arith.constant 3 : index
    %c4_46 = arith.constant 4 : index
    %204 = arith.index_cast %1 : i32 to index
    %205 = vector.load %arg2[%c3_45, %c4_46, %204] : memref<4x9x128xf32, #tpu.memory_space<vmem>>, vector<1x1x128xf32>
    %206 = vector.shape_cast %205 : vector<1x1x128xf32> to vector<128xf32>
    %207 = vector.shape_cast %203 : vector<128xf32> to vector<1x1x128xf32>
    tpu.vector_store %arg2[%c3_45, %c4_46, %204], %207 {strides = array<i32>} : memref<4x9x128xf32, #tpu.memory_space<vmem>>, vector<1x1x128xf32>,
    %208 = vector.extract_strided_slice %18 {offsets = [5, 0], sizes = [1, 128], strides = [1, 1]} : vector<9x128xf32> to vector<1x128xf32>
    %209 = vector.shape_cast %208 : vector<1x128xf32> to vector<128xf32>
    %210 = vector.shape_cast %209 : vector<128xf32> to vector<1x128xf32>
    %211 = vector.broadcast %210 : vector<1x128xf32> to vector<9x128xf32>
    %212 = arith.subf %211, %18 : vector<9x128xf32>
    %213 = vector.extract_strided_slice %21 {offsets = [5, 0], sizes = [1, 128], strides = [1, 1]} : vector<9x128xf32> to vector<1x128xf32>
    %214 = vector.shape_cast %213 : vector<1x128xf32> to vector<128xf32>
    %215 = vector.shape_cast %214 : vector<128xf32> to vector<1x128xf32>
    %216 = vector.broadcast %215 : vector<1x128xf32> to vector<9x128xf32>
    %217 = arith.subf %216, %21 : vector<9x128xf32>
    %218 = arith.mulf %212, %212 : vector<9x128xf32>
    %219 = arith.mulf %217, %217 : vector<9x128xf32>
    %220 = arith.addf %218, %219 : vector<9x128xf32>
    %c5_i32 = arith.constant 5 : i32
    %221 = vector.broadcast %c5_i32 : i32 to vector<9x128xi32>
    %222 = arith.cmpi eq, %22, %221 : vector<9x128xi32>
    %223 = arith.extui %222 : vector<9x128xi1> to vector<9x128xi32>
    %224 = arith.sitofp %223 : vector<9x128xi32> to vector<9x128xf32>
    %225 = arith.addf %220, %224 : vector<9x128xf32>
    %226 = math.rsqrt %225 : vector<9x128xf32>
    %227 = arith.mulf %226, %226 : vector<9x128xf32>
    %228 = arith.mulf %227, %226 : vector<9x128xf32>
    %229 = arith.mulf %212, %228 : vector<9x128xf32>
    %cst_47 = arith.constant dense<0.000000e+00> : vector<128xf32>
    %230 = vector.multi_reduction <add>, %229, %cst_47 [0] : vector<9x128xf32> to vector<128xf32>
    %cst_48 = arith.constant 0.000000e+00 : f32
    %231 = vector.broadcast %cst_48 : f32 to vector<128xf32>
    %232 = arith.subf %231, %230 : vector<128xf32>
    %c2_49 = arith.constant 2 : index
    %c5 = arith.constant 5 : index
    %233 = arith.index_cast %1 : i32 to index
    %234 = vector.load %arg2[%c2_49, %c5, %233] : memref<4x9x128xf32, #tpu.memory_space<vmem>>, vector<1x1x128xf32>
    %235 = vector.shape_cast %234 : vector<1x1x128xf32> to vector<128xf32>
    %236 = vector.shape_cast %232 : vector<128xf32> to vector<1x1x128xf32>
    tpu.vector_store %arg2[%c2_49, %c5, %233], %236 {strides = array<i32>} : memref<4x9x128xf32, #tpu.memory_space<vmem>>, vector<1x1x128xf32>,
    %237 = arith.mulf %217, %228 : vector<9x128xf32>
    %cst_50 = arith.constant dense<0.000000e+00> : vector<128xf32>
    %238 = vector.multi_reduction <add>, %237, %cst_50 [0] : vector<9x128xf32> to vector<128xf32>
    %cst_51 = arith.constant 0.000000e+00 : f32
    %239 = vector.broadcast %cst_51 : f32 to vector<128xf32>
    %240 = arith.subf %239, %238 : vector<128xf32>
    %c3_52 = arith.constant 3 : index
    %c5_53 = arith.constant 5 : index
    %241 = arith.index_cast %1 : i32 to index
    %242 = vector.load %arg2[%c3_52, %c5_53, %241] : memref<4x9x128xf32, #tpu.memory_space<vmem>>, vector<1x1x128xf32>
    %243 = vector.shape_cast %242 : vector<1x1x128xf32> to vector<128xf32>
    %244 = vector.shape_cast %240 : vector<128xf32> to vector<1x1x128xf32>
    tpu.vector_store %arg2[%c3_52, %c5_53, %241], %244 {strides = array<i32>} : memref<4x9x128xf32, #tpu.memory_space<vmem>>, vector<1x1x128xf32>,
    %245 = vector.extract_strided_slice %18 {offsets = [6, 0], sizes = [1, 128], strides = [1, 1]} : vector<9x128xf32> to vector<1x128xf32>
    %246 = vector.shape_cast %245 : vector<1x128xf32> to vector<128xf32>
    %247 = vector.shape_cast %246 : vector<128xf32> to vector<1x128xf32>
    %248 = vector.broadcast %247 : vector<1x128xf32> to vector<9x128xf32>
    %249 = arith.subf %248, %18 : vector<9x128xf32>
    %250 = vector.extract_strided_slice %21 {offsets = [6, 0], sizes = [1, 128], strides = [1, 1]} : vector<9x128xf32> to vector<1x128xf32>
    %251 = vector.shape_cast %250 : vector<1x128xf32> to vector<128xf32>
    %252 = vector.shape_cast %251 : vector<128xf32> to vector<1x128xf32>
    %253 = vector.broadcast %252 : vector<1x128xf32> to vector<9x128xf32>
    %254 = arith.subf %253, %21 : vector<9x128xf32>
    %255 = arith.mulf %249, %249 : vector<9x128xf32>
    %256 = arith.mulf %254, %254 : vector<9x128xf32>
    %257 = arith.addf %255, %256 : vector<9x128xf32>
    %c6_i32 = arith.constant 6 : i32
    %258 = vector.broadcast %c6_i32 : i32 to vector<9x128xi32>
    %259 = arith.cmpi eq, %22, %258 : vector<9x128xi32>
    %260 = arith.extui %259 : vector<9x128xi1> to vector<9x128xi32>
    %261 = arith.sitofp %260 : vector<9x128xi32> to vector<9x128xf32>
    %262 = arith.addf %257, %261 : vector<9x128xf32>
    %263 = math.rsqrt %262 : vector<9x128xf32>
    %264 = arith.mulf %263, %263 : vector<9x128xf32>
    %265 = arith.mulf %264, %263 : vector<9x128xf32>
    %266 = arith.mulf %249, %265 : vector<9x128xf32>
    %cst_54 = arith.constant dense<0.000000e+00> : vector<128xf32>
    %267 = vector.multi_reduction <add>, %266, %cst_54 [0] : vector<9x128xf32> to vector<128xf32>
    %cst_55 = arith.constant 0.000000e+00 : f32
    %268 = vector.broadcast %cst_55 : f32 to vector<128xf32>
    %269 = arith.subf %268, %267 : vector<128xf32>
    %c2_56 = arith.constant 2 : index
    %c6 = arith.constant 6 : index
    %270 = arith.index_cast %1 : i32 to index
    %271 = vector.load %arg2[%c2_56, %c6, %270] : memref<4x9x128xf32, #tpu.memory_space<vmem>>, vector<1x1x128xf32>
    %272 = vector.shape_cast %271 : vector<1x1x128xf32> to vector<128xf32>
    %273 = vector.shape_cast %269 : vector<128xf32> to vector<1x1x128xf32>
    tpu.vector_store %arg2[%c2_56, %c6, %270], %273 {strides = array<i32>} : memref<4x9x128xf32, #tpu.memory_space<vmem>>, vector<1x1x128xf32>,
    %274 = arith.mulf %254, %265 : vector<9x128xf32>
    %cst_57 = arith.constant dense<0.000000e+00> : vector<128xf32>
    %275 = vector.multi_reduction <add>, %274, %cst_57 [0] : vector<9x128xf32> to vector<128xf32>
    %cst_58 = arith.constant 0.000000e+00 : f32
    %276 = vector.broadcast %cst_58 : f32 to vector<128xf32>
    %277 = arith.subf %276, %275 : vector<128xf32>
    %c3_59 = arith.constant 3 : index
    %c6_60 = arith.constant 6 : index
    %278 = arith.index_cast %1 : i32 to index
    %279 = vector.load %arg2[%c3_59, %c6_60, %278] : memref<4x9x128xf32, #tpu.memory_space<vmem>>, vector<1x1x128xf32>
    %280 = vector.shape_cast %279 : vector<1x1x128xf32> to vector<128xf32>
    %281 = vector.shape_cast %277 : vector<128xf32> to vector<1x1x128xf32>
    tpu.vector_store %arg2[%c3_59, %c6_60, %278], %281 {strides = array<i32>} : memref<4x9x128xf32, #tpu.memory_space<vmem>>, vector<1x1x128xf32>,
    %282 = vector.extract_strided_slice %18 {offsets = [7, 0], sizes = [1, 128], strides = [1, 1]} : vector<9x128xf32> to vector<1x128xf32>
    %283 = vector.shape_cast %282 : vector<1x128xf32> to vector<128xf32>
    %284 = vector.shape_cast %283 : vector<128xf32> to vector<1x128xf32>
    %285 = vector.broadcast %284 : vector<1x128xf32> to vector<9x128xf32>
    %286 = arith.subf %285, %18 : vector<9x128xf32>
    %287 = vector.extract_strided_slice %21 {offsets = [7, 0], sizes = [1, 128], strides = [1, 1]} : vector<9x128xf32> to vector<1x128xf32>
    %288 = vector.shape_cast %287 : vector<1x128xf32> to vector<128xf32>
    %289 = vector.shape_cast %288 : vector<128xf32> to vector<1x128xf32>
    %290 = vector.broadcast %289 : vector<1x128xf32> to vector<9x128xf32>
    %291 = arith.subf %290, %21 : vector<9x128xf32>
    %292 = arith.mulf %286, %286 : vector<9x128xf32>
    %293 = arith.mulf %291, %291 : vector<9x128xf32>
    %294 = arith.addf %292, %293 : vector<9x128xf32>
    %c7_i32 = arith.constant 7 : i32
    %295 = vector.broadcast %c7_i32 : i32 to vector<9x128xi32>
    %296 = arith.cmpi eq, %22, %295 : vector<9x128xi32>
    %297 = arith.extui %296 : vector<9x128xi1> to vector<9x128xi32>
    %298 = arith.sitofp %297 : vector<9x128xi32> to vector<9x128xf32>
    %299 = arith.addf %294, %298 : vector<9x128xf32>
    %300 = math.rsqrt %299 : vector<9x128xf32>
    %301 = arith.mulf %300, %300 : vector<9x128xf32>
    %302 = arith.mulf %301, %300 : vector<9x128xf32>
    %303 = arith.mulf %286, %302 : vector<9x128xf32>
    %cst_61 = arith.constant dense<0.000000e+00> : vector<128xf32>
    %304 = vector.multi_reduction <add>, %303, %cst_61 [0] : vector<9x128xf32> to vector<128xf32>
    %cst_62 = arith.constant 0.000000e+00 : f32
    %305 = vector.broadcast %cst_62 : f32 to vector<128xf32>
    %306 = arith.subf %305, %304 : vector<128xf32>
    %c2_63 = arith.constant 2 : index
    %c7 = arith.constant 7 : index
    %307 = arith.index_cast %1 : i32 to index
    %308 = vector.load %arg2[%c2_63, %c7, %307] : memref<4x9x128xf32, #tpu.memory_space<vmem>>, vector<1x1x128xf32>
    %309 = vector.shape_cast %308 : vector<1x1x128xf32> to vector<128xf32>
    %310 = vector.shape_cast %306 : vector<128xf32> to vector<1x1x128xf32>
    tpu.vector_store %arg2[%c2_63, %c7, %307], %310 {strides = array<i32>} : memref<4x9x128xf32, #tpu.memory_space<vmem>>, vector<1x1x128xf32>,
    %311 = arith.mulf %291, %302 : vector<9x128xf32>
    %cst_64 = arith.constant dense<0.000000e+00> : vector<128xf32>
    %312 = vector.multi_reduction <add>, %311, %cst_64 [0] : vector<9x128xf32> to vector<128xf32>
    %cst_65 = arith.constant 0.000000e+00 : f32
    %313 = vector.broadcast %cst_65 : f32 to vector<128xf32>
    %314 = arith.subf %313, %312 : vector<128xf32>
    %c3_66 = arith.constant 3 : index
    %c7_67 = arith.constant 7 : index
    %315 = arith.index_cast %1 : i32 to index
    %316 = vector.load %arg2[%c3_66, %c7_67, %315] : memref<4x9x128xf32, #tpu.memory_space<vmem>>, vector<1x1x128xf32>
    %317 = vector.shape_cast %316 : vector<1x1x128xf32> to vector<128xf32>
    %318 = vector.shape_cast %314 : vector<128xf32> to vector<1x1x128xf32>
    tpu.vector_store %arg2[%c3_66, %c7_67, %315], %318 {strides = array<i32>} : memref<4x9x128xf32, #tpu.memory_space<vmem>>, vector<1x1x128xf32>,
    %319 = vector.extract_strided_slice %18 {offsets = [8, 0], sizes = [1, 128], strides = [1, 1]} : vector<9x128xf32> to vector<1x128xf32>
    %320 = vector.shape_cast %319 : vector<1x128xf32> to vector<128xf32>
    %321 = vector.shape_cast %320 : vector<128xf32> to vector<1x128xf32>
    %322 = vector.broadcast %321 : vector<1x128xf32> to vector<9x128xf32>
    %323 = arith.subf %322, %18 : vector<9x128xf32>
    %324 = vector.extract_strided_slice %21 {offsets = [8, 0], sizes = [1, 128], strides = [1, 1]} : vector<9x128xf32> to vector<1x128xf32>
    %325 = vector.shape_cast %324 : vector<1x128xf32> to vector<128xf32>
    %326 = vector.shape_cast %325 : vector<128xf32> to vector<1x128xf32>
    %327 = vector.broadcast %326 : vector<1x128xf32> to vector<9x128xf32>
    %328 = arith.subf %327, %21 : vector<9x128xf32>
    %329 = arith.mulf %323, %323 : vector<9x128xf32>
    %330 = arith.mulf %328, %328 : vector<9x128xf32>
    %331 = arith.addf %329, %330 : vector<9x128xf32>
    %c8_i32 = arith.constant 8 : i32
    %332 = vector.broadcast %c8_i32 : i32 to vector<9x128xi32>
    %333 = arith.cmpi eq, %22, %332 : vector<9x128xi32>
    %334 = arith.extui %333 : vector<9x128xi1> to vector<9x128xi32>
    %335 = arith.sitofp %334 : vector<9x128xi32> to vector<9x128xf32>
    %336 = arith.addf %331, %335 : vector<9x128xf32>
    %337 = math.rsqrt %336 : vector<9x128xf32>
    %338 = arith.mulf %337, %337 : vector<9x128xf32>
    %339 = arith.mulf %338, %337 : vector<9x128xf32>
    %340 = arith.mulf %323, %339 : vector<9x128xf32>
    %cst_68 = arith.constant dense<0.000000e+00> : vector<128xf32>
    %341 = vector.multi_reduction <add>, %340, %cst_68 [0] : vector<9x128xf32> to vector<128xf32>
    %cst_69 = arith.constant 0.000000e+00 : f32
    %342 = vector.broadcast %cst_69 : f32 to vector<128xf32>
    %343 = arith.subf %342, %341 : vector<128xf32>
    %c2_70 = arith.constant 2 : index
    %c8 = arith.constant 8 : index
    %344 = arith.index_cast %1 : i32 to index
    %345 = vector.load %arg2[%c2_70, %c8, %344] : memref<4x9x128xf32, #tpu.memory_space<vmem>>, vector<1x1x128xf32>
    %346 = vector.shape_cast %345 : vector<1x1x128xf32> to vector<128xf32>
    %347 = vector.shape_cast %343 : vector<128xf32> to vector<1x1x128xf32>
    tpu.vector_store %arg2[%c2_70, %c8, %344], %347 {strides = array<i32>} : memref<4x9x128xf32, #tpu.memory_space<vmem>>, vector<1x1x128xf32>,
    %348 = arith.mulf %328, %339 : vector<9x128xf32>
    %cst_71 = arith.constant dense<0.000000e+00> : vector<128xf32>
    %349 = vector.multi_reduction <add>, %348, %cst_71 [0] : vector<9x128xf32> to vector<128xf32>
    %cst_72 = arith.constant 0.000000e+00 : f32
    %350 = vector.broadcast %cst_72 : f32 to vector<128xf32>
    %351 = arith.subf %350, %349 : vector<128xf32>
    %c3_73 = arith.constant 3 : index
    %c8_74 = arith.constant 8 : index
    %352 = arith.index_cast %1 : i32 to index
    %353 = vector.load %arg2[%c3_73, %c8_74, %352] : memref<4x9x128xf32, #tpu.memory_space<vmem>>, vector<1x1x128xf32>
    %354 = vector.shape_cast %353 : vector<1x1x128xf32> to vector<128xf32>
    %355 = vector.shape_cast %351 : vector<128xf32> to vector<1x1x128xf32>
    tpu.vector_store %arg2[%c3_73, %c8_74, %352], %355 {strides = array<i32>} : memref<4x9x128xf32, #tpu.memory_space<vmem>>, vector<1x1x128xf32>,
    %c1_i32_75 = arith.constant 1 : i32
    return
  }
  func.func @transform_0(%arg0: i32) -> (i32, i32, i32) {
    %c0_i32 = arith.constant 0 : i32
    %c0_i32_0 = arith.constant 0 : i32
    %c0_i32_1 = arith.constant 0 : i32
    return %c0_i32, %c0_i32_0, %arg0 : i32, i32, i32
  }
  func.func @transform_1(%arg0: i32) -> (i32, i32, i32) {
    %c0_i32 = arith.constant 0 : i32
    %c0_i32_0 = arith.constant 0 : i32
    %c0_i32_1 = arith.constant 0 : i32
    return %c0_i32, %c0_i32_0, %arg0 : i32, i32, i32
  }
}

</mosaic_0001>

<llo_original>
// kernel: manybody_forward.1
$region0: #{manybody_forward.1}
  #allocation0 [shape = 'u32[]', space=smem, size = 0x4, offset = 0x4, fixed_abs, tag = 'smem constant byte address 0x4 - core index']
  #allocation1 [shape = 'u32[144,128]{1,0:T(1,128)}', space=vmem, size = 0x12000, scoped, tag = 'internal scratch']
  %s0 = inlined_call_operand.vmem [shape: f32[4,9,128], index: 0, kind: input, shape index: {}]
  %s1 = inlined_call_operand.vmem [shape: f32[4,9,128], index: 1, kind: output, shape index: {}]
  %s2 = sld [smem:[#allocation0]]
  $region14: #{manybody_forward.1} parent=0
    _
  %s4 = ssub.s32 1, %s2
  %s5 = scalar_select 0, %s4, %s2
  // Predicated region
  $region2: #{manybody_forward.1} parent=0 // pred_check
    _
  $region3: #{manybody_forward.1} parent=0 // pred_check_branch
    %7 = sbr.rel (0) target = $region5
  $region4: #{manybody_forward.1} parent=0 // pred_region
    _
  $region5: #{manybody_forward.1} parent=0 // pred_fallthru
    _
  %s8 = sadd.s32 0, 32
  %s9 = scalar_lea.vmem %s0, %s8
  %v10 = vld [vmem:[%s9] sm:$0xff]
  %v11 = vld [vmem:[%s9 + $0x8] sm:$0x1]
  %12 = vst [vmem:[%s1] sm:$0xff] %v10
  %13 = vst [vmem:[%s1 + $0x8] sm:$0x1] %v11
  %s14 = sadd.s32 0, 48
  %s15 = scalar_lea.vmem %s0, %s14
  %v16 = vld [vmem:[%s15] sm:$0xff]
  %v17 = vld [vmem:[%s15 + $0x8] sm:$0x1]
  %s18 = sadd.s32 0, 16
  %s19 = scalar_lea.vmem %s1, %s18
  %20 = vst [vmem:[%s19] sm:$0xff] %v16
  %21 = vst [vmem:[%s19 + $0x8] sm:$0x1] %v17
  %v22 = vld [vmem:[%s0] sm:$0xff]
  %v23 = vld [vmem:[%s0 + $0x8] sm:$0x1]
  %s24 = scalar_lea.vmem %s0, %s18
  %v25 = vld [vmem:[%s24] sm:$0xff]
  %v26 = vld [vmem:[%s24 + $0x8] sm:$0x1]
  %v27 = vlaneseq
  %v28 = vshrl.u32 %v27, 7
  %v29 = vadd.s32 %v28, 8
  %v30 = vlaneseq
  %v31 = vshrl.u32 %v30, 7
  %v32 = vsub.s32 0, %v31
  %v33 = vrot.slane %v22, %v32
  %v34 = vsub.f32 %v33, %v22
  %v35 = vsub.f32 %v33, %v23
  %v36 = vlaneseq
  %v37 = vshrl.u32 %v36, 7
  %v38 = vsub.s32 0, %v37
  %v39 = vrot.slane %v25, %v38
  %v40 = vsub.f32 %v39, %v25
  %v41 = vsub.f32 %v39, %v26
  %v42 = vmul.f32 %v34, %v34
  %v43 = vmul.f32 %v35, %v35
  %v44 = vmul.f32 %v40, %v40
  %v45 = vmul.f32 %v41, %v41
  %v46 = vadd.f32 %v42, %v44
  %v47 = vadd.f32 %v43, %v45
  %vm48 = vcmp.eq.s32.totalorder %v28, 0
  %vm49 = vcmp.eq.s32.totalorder %v29, 0
  %v50 = vsel %vm48, 1, 0
  %v51 = vsel %vm49, 1, 0
  %v52 = vcvt.s32.f32 %v50
  %v53 = vcvt.s32.f32 %v51
  %v54 = vadd.f32 %v46, %v52
  %v55 = vadd.f32 %v47, %v53
  %v56 = vrsqrt.pop %v54
  %v57 = vrsqrt.pop %v55
  %v58 = vmul.f32 %v56, %v56
  %v59 = vmul.f32 %v57, %v57
  %v60 = vmul.f32 %v58, %v56
  %v61 = vmul.f32 %v59, %v57
  %v62 = vmul.f32 %v34, %v60
  %v63 = vmul.f32 %v35, %v61
  %vm64 = vcmask 1040384
  %v65 = vsel %vm64, %v63, 0.0
  %v66 = vadd.f32 %v62, %v65
  %v67 = vrot.slane %v66, 4
  %v68 = vadd.f32 %v66, %v67
  %v69 = vrot.slane %v68, 2
  %v70 = vadd.f32 %v68, %v69
  %v71 = vrot.slane %v70, 1
  %v72 = vadd.f32 %v70, %v71
  %v73 = vsub.f32 0.0, %v72
  %s74 = scalar_lea.vmem %s1, %s8
  %75 = vst [vmem:[%s74] sm:$0x1] %v73
  %v76 = vmul.f32 %v40, %v60
  %v77 = vmul.f32 %v41, %v61
  %v78 = vsel %vm64, %v77, 0.0
  %v79 = vadd.f32 %v76, %v78
  %v80 = vrot.slane %v79, 4
  %v81 = vadd.f32 %v79, %v80
  %v82 = vrot.slane %v81, 2
  %v83 = vadd.f32 %v81, %v82
  %v84 = vrot.slane %v83, 1
  %v85 = vadd.f32 %v83, %v84
  %v86 = vsub.f32 0.0, %v85
  %s87 = scalar_lea.vmem %s1, %s14
  %88 = vst [vmem:[%s87] sm:$0x1] %v86
  %v89 = vlaneseq
  %v90 = vshrl.u32 %v89, 7
  %v91 = vsub.s32 1, %v90
  %v92 = vrot.slane %v22, %v91
  %v93 = vsub.f32 %v92, %v22
  %v94 = vsub.f32 %v92, %v23
  %v95 = vlaneseq
  %v96 = vshrl.u32 %v95, 7
  %v97 = vsub.s32 1, %v96
  %v98 = vrot.slane %v25, %v97
  %v99 = vsub.f32 %v98, %v25
  %v100 = vsub.f32 %v98, %v26
  %v101 = vmul.f32 %v93, %v93
  %v102 = vmul.f32 %v94, %v94
  %v103 = vmul.f32 %v99, %v99
  %v104 = vmul.f32 %v100, %v100
  %v105 = vadd.f32 %v101, %v103
  %v106 = vadd.f32 %v102, %v104
  %vm107 = vcmp.eq.s32.totalorder %v28, 1
  %vm108 = vcmp.eq.s32.totalorder %v29, 1
  %v109 = vsel %vm107, 1, 0
  %v110 = vsel %vm108, 1, 0
  %v111 = vcvt.s32.f32 %v109
  %v112 = vcvt.s32.f32 %v110
  %v113 = vadd.f32 %v105, %v111
  %v114 = vadd.f32 %v106, %v112
  %v115 = vrsqrt.pop %v113
  %v116 = vrsqrt.pop %v114
  %v117 = vmul.f32 %v115, %v115
  %v118 = vmul.f32 %v116, %v116
  %v119 = vmul.f32 %v117, %v115
  %v120 = vmul.f32 %v118, %v116
  %v121 = vmul.f32 %v93, %v119
  %v122 = vmul.f32 %v94, %v120
  %v123 = vsel %vm64, %v122, 0.0
  %v124 = vadd.f32 %v121, %v123
  %v125 = vrot.slane %v124, 4
  %v126 = vadd.f32 %v124, %v125
  %v127 = vrot.slane %v126, 2
  %v128 = vadd.f32 %v126, %v127
  %v129 = vrot.slane %v128, 1
  %v130 = vadd.f32 %v128, %v129
  %v131 = vsub.f32 0.0, %v130
  %132 = vst [vmem:[%s74 + $0x1] sm:$0x1] %v131
  %v133 = vmul.f32 %v99, %v119
  %v134 = vmul.f32 %v100, %v120
  %v135 = vsel %vm64, %v134, 0.0
  %v136 = vadd.f32 %v133, %v135
  %v137 = vrot.slane %v136, 4
  %v138 = vadd.f32 %v136, %v137
  %v139 = vrot.slane %v138, 2
  %v140 = vadd.f32 %v138, %v139
  %v141 = vrot.slane %v140, 1
  %v142 = vadd.f32 %v140, %v141
  %v143 = vsub.f32 0.0, %v142
  %144 = vst [vmem:[%s87 + $0x1] sm:$0x1] %v143
  %v145 = vlaneseq
  %v146 = vshrl.u32 %v145, 7
  %v147 = vsub.s32 2, %v146
  %v148 = vrot.slane %v22, %v147
  %v149 = vsub.f32 %v148, %v22
  %v150 = vsub.f32 %v148, %v23
  %v151 = vlaneseq
  %v152 = vshrl.u32 %v151, 7
  %v153 = vsub.s32 2, %v152
  %v154 = vrot.slane %v25, %v153
  %v155 = vsub.f32 %v154, %v25
  %v156 = vsub.f32 %v154, %v26
  %v157 = vmul.f32 %v149, %v149
  %v158 = vmul.f32 %v150, %v150
  %v159 = vmul.f32 %v155, %v155
  %v160 = vmul.f32 %v156, %v156
  %v161 = vadd.f32 %v157, %v159
  %v162 = vadd.f32 %v158, %v160
  %vm163 = vcmp.eq.s32.totalorder %v28, 2
  %vm164 = vcmp.eq.s32.totalorder %v29, 2
  %v165 = vsel %vm163, 1, 0
  %v166 = vsel %vm164, 1, 0
  %v167 = vcvt.s32.f32 %v165
  %v168 = vcvt.s32.f32 %v166
  %v169 = vadd.f32 %v161, %v167
  %v170 = vadd.f32 %v162, %v168
  %v171 = vrsqrt.pop %v169
  %v172 = vrsqrt.pop %v170
  %v173 = vmul.f32 %v171, %v171
  %v174 = vmul.f32 %v172, %v172
  %v175 = vmul.f32 %v173, %v171
  %v176 = vmul.f32 %v174, %v172
  %v177 = vmul.f32 %v149, %v175
  %v178 = vmul.f32 %v150, %v176
  %v179 = vsel %vm64, %v178, 0.0
  %v180 = vadd.f32 %v177, %v179
  %v181 = vrot.slane %v180, 4
  %v182 = vadd.f32 %v180, %v181
  %v183 = vrot.slane %v182, 2
  %v184 = vadd.f32 %v182, %v183
  %v185 = vrot.slane %v184, 1
  %v186 = vadd.f32 %v184, %v185
  %v187 = vsub.f32 0.0, %v186
  %188 = vst [vmem:[%s74 + $0x2] sm:$0x1] %v187
  %v189 = vmul.f32 %v155, %v175
  %v190 = vmul.f32 %v156, %v176
  %v191 = vsel %vm64, %v190, 0.0
  %v192 = vadd.f32 %v189, %v191
  %v193 = vrot.slane %v192, 4
  %v194 = vadd.f32 %v192, %v193
  %v195 = vrot.slane %v194, 2
  %v196 = vadd.f32 %v194, %v195
  %v197 = vrot.slane %v196, 1
  %v198 = vadd.f32 %v196, %v197
  %v199 = vsub.f32 0.0, %v198
  %200 = vst [vmem:[%s87 + $0x2] sm:$0x1] %v199
  %v201 = vlaneseq
  %v202 = vshrl.u32 %v201, 7
  %v203 = vsub.s32 3, %v202
  %v204 = vrot.slane %v22, %v203
  %v205 = vsub.f32 %v204, %v22
  %v206 = vsub.f32 %v204, %v23
  %v207 = vlaneseq
  %v208 = vshrl.u32 %v207, 7
  %v209 = vsub.s32 3, %v208
  %v210 = vrot.slane %v25, %v209
  %v211 = vsub.f32 %v210, %v25
  %v212 = vsub.f32 %v210, %v26
  %v213 = vmul.f32 %v205, %v205
  %v214 = vmul.f32 %v206, %v206
  %v215 = vmul.f32 %v211, %v211
  %v216 = vmul.f32 %v212, %v212
  %v217 = vadd.f32 %v213, %v215
  %v218 = vadd.f32 %v214, %v216
  %vm219 = vcmp.eq.s32.totalorder %v28, 3
  %vm220 = vcmp.eq.s32.totalorder %v29, 3
  %v221 = vsel %vm219, 1, 0
  %v222 = vsel %vm220, 1, 0
  %v223 = vcvt.s32.f32 %v221
  %v224 = vcvt.s32.f32 %v222
  %v225 = vadd.f32 %v217, %v223
  %v226 = vadd.f32 %v218, %v224
  %v227 = vrsqrt.pop %v225
  %v228 = vrsqrt.pop %v226
  %v229 = vmul.f32 %v227, %v227
  %v230 = vmul.f32 %v228, %v228
  %v231 = vmul.f32 %v229, %v227
  %v232 = vmul.f32 %v230, %v228
  %v233 = vmul.f32 %v205, %v231
  %v234 = vmul.f32 %v206, %v232
  %v235 = vsel %vm64, %v234, 0.0
  %v236 = vadd.f32 %v233, %v235
  %v237 = vrot.slane %v236, 4
  %v238 = vadd.f32 %v236, %v237
  %v239 = vrot.slane %v238, 2
  %v240 = vadd.f32 %v238, %v239
  %v241 = vrot.slane %v240, 1
  %v242 = vadd.f32 %v240, %v241
  %v243 = vsub.f32 0.0, %v242
  %244 = vst [vmem:[%s74 + $0x3] sm:$0x1] %v243
  %v245 = vmul.f32 %v211, %v231
  %v246 = vmul.f32 %v212, %v232
  %v247 = vsel %vm64, %v246, 0.0
  %v248 = vadd.f32 %v245, %v247
  %v249 = vrot.slane %v248, 4
  %v250 = vadd.f32 %v248, %v249
  %v251 = vrot.slane %v250, 2
  %v252 = vadd.f32 %v250, %v251
  %v253 = vrot.slane %v252, 1
  %v254 = vadd.f32 %v252, %v253
  %v255 = vsub.f32 0.0, %v254
  %256 = vst [vmem:[%s87 + $0x3] sm:$0x1] %v255
  %v257 = vlaneseq
  %v258 = vshrl.u32 %v257, 7
  %v259 = vsub.s32 4, %v258
  %v260 = vrot.slane %v22, %v259
  %v261 = vsub.f32 %v260, %v22
  %v262 = vsub.f32 %v260, %v23
  %v263 = vlaneseq
  %v264 = vshrl.u32 %v263, 7
  %v265 = vsub.s32 4, %v264
  %v266 = vrot.slane %v25, %v265
  %v267 = vsub.f32 %v266, %v25
  %v268 = vsub.f32 %v266, %v26
  %v269 = vmul.f32 %v261, %v261
  %v270 = vmul.f32 %v262, %v262
  %v271 = vmul.f32 %v267, %v267
  %v272 = vmul.f32 %v268, %v268
  %v273 = vadd.f32 %v269, %v271
  %v274 = vadd.f32 %v270, %v272
  %vm275 = vcmp.eq.s32.totalorder %v28, 4
  %vm276 = vcmp.eq.s32.totalorder %v29, 4
  %v277 = vsel %vm275, 1, 0
  %v278 = vsel %vm276, 1, 0
  %v279 = vcvt.s32.f32 %v277
  %v280 = vcvt.s32.f32 %v278
  %v281 = vadd.f32 %v273, %v279
  %v282 = vadd.f32 %v274, %v280
  %v283 = vrsqrt.pop %v281
  %v284 = vrsqrt.pop %v282
  %v285 = vmul.f32 %v283, %v283
  %v286 = vmul.f32 %v284, %v284
  %v287 = vmul.f32 %v285, %v283
  %v288 = vmul.f32 %v286, %v284
  %v289 = vmul.f32 %v261, %v287
  %v290 = vmul.f32 %v262, %v288
  %v291 = vsel %vm64, %v290, 0.0
  %v292 = vadd.f32 %v289, %v291
  %v293 = vrot.slane %v292, 4
  %v294 = vadd.f32 %v292, %v293
  %v295 = vrot.slane %v294, 2
  %v296 = vadd.f32 %v294, %v295
  %v297 = vrot.slane %v296, 1
  %v298 = vadd.f32 %v296, %v297
  %v299 = vsub.f32 0.0, %v298
  %300 = vst [vmem:[%s74 + $0x4] sm:$0x1] %v299
  %v301 = vmul.f32 %v267, %v287
  %v302 = vmul.f32 %v268, %v288
  %v303 = vsel %vm64, %v302, 0.0
  %v304 = vadd.f32 %v301, %v303
  %v305 = vrot.slane %v304, 4
  %v306 = vadd.f32 %v304, %v305
  %v307 = vrot.slane %v306, 2
  %v308 = vadd.f32 %v306, %v307
  %v309 = vrot.slane %v308, 1
  %v310 = vadd.f32 %v308, %v309
  %v311 = vsub.f32 0.0, %v310
  %312 = vst [vmem:[%s87 + $0x4] sm:$0x1] %v311
  %v313 = vlaneseq
  %v314 = vshrl.u32 %v313, 7
  %v315 = vsub.s32 5, %v314
  %v316 = vrot.slane %v22, %v315
  %v317 = vsub.f32 %v316, %v22
  %v318 = vsub.f32 %v316, %v23
  %v319 = vlaneseq
  %v320 = vshrl.u32 %v319, 7
  %v321 = vsub.s32 5, %v320
  %v322 = vrot.slane %v25, %v321
  %v323 = vsub.f32 %v322, %v25
  %v324 = vsub.f32 %v322, %v26
  %v325 = vmul.f32 %v317, %v317
  %v326 = vmul.f32 %v318, %v318
  %v327 = vmul.f32 %v323, %v323
  %v328 = vmul.f32 %v324, %v324
  %v329 = vadd.f32 %v325, %v327
  %v330 = vadd.f32 %v326, %v328
  %vm331 = vcmp.eq.s32.totalorder %v28, 5
  %vm332 = vcmp.eq.s32.totalorder %v29, 5
  %v333 = vsel %vm331, 1, 0
  %v334 = vsel %vm332, 1, 0
  %v335 = vcvt.s32.f32 %v333
  %v336 = vcvt.s32.f32 %v334
  %v337 = vadd.f32 %v329, %v335
  %v338 = vadd.f32 %v330, %v336
  %v339 = vrsqrt.pop %v337
  %v340 = vrsqrt.pop %v338
  %v341 = vmul.f32 %v339, %v339
  %v342 = vmul.f32 %v340, %v340
  %v343 = vmul.f32 %v341, %v339
  %v344 = vmul.f32 %v342, %v340
  %v345 = vmul.f32 %v317, %v343
  %v346 = vmul.f32 %v318, %v344
  %v347 = vsel %vm64, %v346, 0.0
  %v348 = vadd.f32 %v345, %v347
  %v349 = vrot.slane %v348, 4
  %v350 = vadd.f32 %v348, %v349
  %v351 = vrot.slane %v350, 2
  %v352 = vadd.f32 %v350, %v351
  %v353 = vrot.slane %v352, 1
  %v354 = vadd.f32 %v352, %v353
  %v355 = vsub.f32 0.0, %v354
  %356 = vst [vmem:[%s74 + $0x5] sm:$0x1] %v355
  %v357 = vmul.f32 %v323, %v343
  %v358 = vmul.f32 %v324, %v344
  %v359 = vsel %vm64, %v358, 0.0
  %v360 = vadd.f32 %v357, %v359
  %v361 = vrot.slane %v360, 4
  %v362 = vadd.f32 %v360, %v361
  %v363 = vrot.slane %v362, 2
  %v364 = vadd.f32 %v362, %v363
  %v365 = vrot.slane %v364, 1
  %v366 = vadd.f32 %v364, %v365
  %v367 = vsub.f32 0.0, %v366
  %368 = vst [vmem:[%s87 + $0x5] sm:$0x1] %v367
  %v369 = vlaneseq
  %v370 = vshrl.u32 %v369, 7
  %v371 = vsub.s32 6, %v370
  %v372 = vrot.slane %v22, %v371
  %v373 = vsub.f32 %v372, %v22
  %v374 = vsub.f32 %v372, %v23
  %v375 = vlaneseq
  %v376 = vshrl.u32 %v375, 7
  %v377 = vsub.s32 6, %v376
  %v378 = vrot.slane %v25, %v377
  %v379 = vsub.f32 %v378, %v25
  %v380 = vsub.f32 %v378, %v26
  %v381 = vmul.f32 %v373, %v373
  %v382 = vmul.f32 %v374, %v374
  %v383 = vmul.f32 %v379, %v379
  %v384 = vmul.f32 %v380, %v380
  %v385 = vadd.f32 %v381, %v383
  %v386 = vadd.f32 %v382, %v384
  %vm387 = vcmp.eq.s32.totalorder %v28, 6
  %vm388 = vcmp.eq.s32.totalorder %v29, 6
  %v389 = vsel %vm387, 1, 0
  %v390 = vsel %vm388, 1, 0
  %v391 = vcvt.s32.f32 %v389
  %v392 = vcvt.s32.f32 %v390
  %v393 = vadd.f32 %v385, %v391
  %v394 = vadd.f32 %v386, %v392
  %v395 = vrsqrt.pop %v393
  %v396 = vrsqrt.pop %v394
  %v397 = vmul.f32 %v395, %v395
  %v398 = vmul.f32 %v396, %v396
  %v399 = vmul.f32 %v397, %v395
  %v400 = vmul.f32 %v398, %v396
  %v401 = vmul.f32 %v373, %v399
  %v402 = vmul.f32 %v374, %v400
  %v403 = vsel %vm64, %v402, 0.0
  %v404 = vadd.f32 %v401, %v403
  %v405 = vrot.slane %v404, 4
  %v406 = vadd.f32 %v404, %v405
  %v407 = vrot.slane %v406, 2
  %v408 = vadd.f32 %v406, %v407
  %v409 = vrot.slane %v408, 1
  %v410 = vadd.f32 %v408, %v409
  %v411 = vsub.f32 0.0, %v410
  %412 = vst [vmem:[%s74 + $0x6] sm:$0x1] %v411
  %v413 = vmul.f32 %v379, %v399
  %v414 = vmul.f32 %v380, %v400
  %v415 = vsel %vm64, %v414, 0.0
  %v416 = vadd.f32 %v413, %v415
  %v417 = vrot.slane %v416, 4
  %v418 = vadd.f32 %v416, %v417
  %v419 = vrot.slane %v418, 2
  %v420 = vadd.f32 %v418, %v419
  %v421 = vrot.slane %v420, 1
  %v422 = vadd.f32 %v420, %v421
  %v423 = vsub.f32 0.0, %v422
  %424 = vst [vmem:[%s87 + $0x6] sm:$0x1] %v423
  %v425 = vlaneseq
  %v426 = vshrl.u32 %v425, 7
  %v427 = vsub.s32 7, %v426
  %v428 = vrot.slane %v22, %v427
  %v429 = vsub.f32 %v428, %v22
  %v430 = vsub.f32 %v428, %v23
  %v431 = vlaneseq
  %v432 = vshrl.u32 %v431, 7
  %v433 = vsub.s32 7, %v432
  %v434 = vrot.slane %v25, %v433
  %v435 = vsub.f32 %v434, %v25
  %v436 = vsub.f32 %v434, %v26
  %v437 = vmul.f32 %v429, %v429
  %v438 = vmul.f32 %v430, %v430
  %v439 = vmul.f32 %v435, %v435
  %v440 = vmul.f32 %v436, %v436
  %v441 = vadd.f32 %v437, %v439
  %v442 = vadd.f32 %v438, %v440
  %vm443 = vcmp.eq.s32.totalorder %v28, 7
  %vm444 = vcmp.eq.s32.totalorder %v29, 7
  %v445 = vsel %vm443, 1, 0
  %v446 = vsel %vm444, 1, 0
  %v447 = vcvt.s32.f32 %v445
  %v448 = vcvt.s32.f32 %v446
  %v449 = vadd.f32 %v441, %v447
  %v450 = vadd.f32 %v442, %v448
  %v451 = vrsqrt.pop %v449
  %v452 = vrsqrt.pop %v450
  %v453 = vmul.f32 %v451, %v451
  %v454 = vmul.f32 %v452, %v452
  %v455 = vmul.f32 %v453, %v451
  %v456 = vmul.f32 %v454, %v452
  %v457 = vmul.f32 %v429, %v455
  %v458 = vmul.f32 %v430, %v456
  %v459 = vsel %vm64, %v458, 0.0
  %v460 = vadd.f32 %v457, %v459
  %v461 = vrot.slane %v460, 4
  %v462 = vadd.f32 %v460, %v461
  %v463 = vrot.slane %v462, 2
  %v464 = vadd.f32 %v462, %v463
  %v465 = vrot.slane %v464, 1
  %v466 = vadd.f32 %v464, %v465
  %v467 = vsub.f32 0.0, %v466
  %468 = vst [vmem:[%s74 + $0x7] sm:$0x1] %v467
  %v469 = vmul.f32 %v435, %v455
  %v470 = vmul.f32 %v436, %v456
  %v471 = vsel %vm64, %v470, 0.0
  %v472 = vadd.f32 %v469, %v471
  %v473 = vrot.slane %v472, 4
  %v474 = vadd.f32 %v472, %v473
  %v475 = vrot.slane %v474, 2
  %v476 = vadd.f32 %v474, %v475
  %v477 = vrot.slane %v476, 1
  %v478 = vadd.f32 %v476, %v477
  %v479 = vsub.f32 0.0, %v478
  %480 = vst [vmem:[%s87 + $0x7] sm:$0x1] %v479
  %v481 = vlaneseq
  %v482 = vshrl.u32 %v481, 7
  %v483 = vsub.s32 0, %v482
  %v484 = vrot.slane %v23, %v483
  %v485 = vsub.f32 %v484, %v22
  %v486 = vsub.f32 %v484, %v23
  %v487 = vlaneseq
  %v488 = vshrl.u32 %v487, 7
  %v489 = vsub.s32 0, %v488
  %v490 = vrot.slane %v26, %v489
  %v491 = vsub.f32 %v490, %v25
  %v492 = vsub.f32 %v490, %v26
  %v493 = vmul.f32 %v485, %v485
  %v494 = vmul.f32 %v486, %v486
  %v495 = vmul.f32 %v491, %v491
  %v496 = vmul.f32 %v492, %v492
  %v497 = vadd.f32 %v493, %v495
  %v498 = vadd.f32 %v494, %v496
  %vm499 = vcmp.eq.s32.totalorder %v28, 8
  %vm500 = vcmp.eq.s32.totalorder %v29, 8
  %v501 = vsel %vm499, 1, 0
  %v502 = vsel %vm500, 1, 0
  %v503 = vcvt.s32.f32 %v501
  %v504 = vcvt.s32.f32 %v502
  %v505 = vadd.f32 %v497, %v503
  %v506 = vadd.f32 %v498, %v504
  %v507 = vrsqrt.pop %v505
  %v508 = vrsqrt.pop %v506
  %v509 = vmul.f32 %v507, %v507
  %v510 = vmul.f32 %v508, %v508
  %v511 = vmul.f32 %v509, %v507
  %v512 = vmul.f32 %v510, %v508
  %v513 = vmul.f32 %v485, %v511
  %v514 = vmul.f32 %v486, %v512
  %v515 = vsel %vm64, %v514, 0.0
  %v516 = vadd.f32 %v513, %v515
  %v517 = vrot.slane %v516, 4
  %v518 = vadd.f32 %v516, %v517
  %v519 = vrot.slane %v518, 2
  %v520 = vadd.f32 %v518, %v519
  %v521 = vrot.slane %v520, 1
  %v522 = vadd.f32 %v520, %v521
  %v523 = vsub.f32 0.0, %v522
  %524 = vst [vmem:[%s74 + $0x8] sm:$0x1] %v523
  %v525 = vmul.f32 %v491, %v511
  %v526 = vmul.f32 %v492, %v512
  %v527 = vsel %vm64, %v526, 0.0
  %v528 = vadd.f32 %v525, %v527
  %v529 = vrot.slane %v528, 4
  %v530 = vadd.f32 %v528, %v529
  %v531 = vrot.slane %v530, 2
  %v532 = vadd.f32 %v530, %v531
  %v533 = vrot.slane %v532, 1
  %v534 = vadd.f32 %v532, %v533
  %v535 = vsub.f32 0.0, %v534
  %536 = vst [vmem:[%s87 + $0x8] sm:$0x1] %v535
  // Predicated region
  $region6: #{manybody_forward.1} parent=0 // pred_check
    _
  $region7: #{manybody_forward.1} parent=0 // pred_check_branch
    %538 = sbr.rel (0) target = $region9
  $region8: #{manybody_forward.1} parent=0 // pred_region
    _
  $region9: #{manybody_forward.1} parent=0 // pred_fallthru
    _
  // Predicated region
  $region10: #{manybody_forward.1} parent=0 // pred_check
    _
  $region11: #{manybody_forward.1} parent=0 // pred_check_branch
    %540 = sbr.rel (0) target = $region13
  $region12: #{manybody_forward.1} parent=0 // pred_region
    _
  $region13: #{manybody_forward.1} parent=0 // pred_fallthru
    _

</llo_original>
